<compile_context>
chip_gen: v7x
topology: tpu7x:2x2x1
jax: 0.10.0
libtpu: 0.0.40
codegen_flags: <defaults>
</compile_context>

<pallas_src>
import jax
import jax.numpy as jnp
from jax.experimental import pallas as pl
from jax.experimental.pallas import tpu as pltpu


_LANE_CANDIDATES = (4096, 2048, 1024, 512, 256, 128)
_TARGET_BLOCK_BYTES = 4 * 1024 * 1024     # ~4 MiB per block buffer
_EVEN_GRID_MIN_BYTES = 2 * 1024 * 1024    # tensors >= this get an even (>=2) grid
_MIN_PALLAS_BYTES = 128 * 1024            # below this, plain XLA fusion wins
_VMEM_LIMIT_BYTES = 32 * 1024 * 1024      # 4 buffers x 4 MiB << 32 MiB (safe on v5e too)


def _hswish_kernel(x_ref, o_ref):
    # Native bf16 math on v6e/v7x; f32 otherwise (v5e has no bf16 VALU but Mosaic
    # handles bf16 there too -- we only special-case non-(f32/bf16) dtypes).
    compute_dtype = (
        x_ref.dtype if x_ref.dtype in (jnp.float32, jnp.bfloat16) else jnp.float32
    )
    x = x_ref[...].astype(compute_dtype)
    zero = jnp.asarray(0.0, compute_dtype)
    three = jnp.asarray(3.0, compute_dtype)
    six = jnp.asarray(6.0, compute_dtype)
    r6 = jnp.minimum(jnp.maximum(x + three, zero), six)       # relu6(x + 3)
    y = x * r6 * jnp.asarray(1.0 / 6.0, compute_dtype)
    o_ref[...] = y.astype(o_ref.dtype)


def _hswish_jnp(x):
    """Plain fused-XLA path for tiny or lane-awkward tensors (one read + one write)."""
    compute_dtype = x.dtype if x.dtype in (jnp.float32, jnp.bfloat16) else jnp.float32
    xf = x.astype(compute_dtype)
    y = xf * jnp.clip(xf + 3.0, 0.0, 6.0) * (1.0 / 6.0)
    return y.astype(x.dtype)


def _choose_tile_rows(rows, lanes, itemsize):
    """Block height chooser.

    Prefers (a) a divisor of rows (no masked partial last block), (b) an even grid
    for tensors >= _EVEN_GRID_MIN_BYTES (balanced 2-TensorCore split on v7x),
    (c) ~_TARGET_BLOCK_BYTES blocks, (d) sublane alignment (8/16/32 rows for
    f32/bf16/int8)."""
    sub = max(8, 32 // max(1, itemsize))
    if rows <= sub:
        return rows                                            # single tiny block
    bytes_per_row = lanes * itemsize
    total_bytes = rows * bytes_per_row
    want_even = total_bytes >= _EVEN_GRID_MIN_BYTES
    max_tile = max(sub, min(rows, _TARGET_BLOCK_BYTES // bytes_per_row))
    max_tile = max(sub, (max_tile // sub) * sub)

    if not want_even and rows <= max_tile:
        return rows                                            # single full-height block

    # Pass 1: divisor of rows, sublane-aligned, even grid (if requested).
    # Pass 2: same but drop the even-grid requirement.
    for need_even in (want_even, False):
        tr = min(max_tile, (rows // sub) * sub)
        while tr >= sub:
            if rows % tr == 0 and (not need_even or (rows // tr) % 2 == 0):
                return tr
            tr -= sub
        if not want_even:
            break
    # Pass 3: no exact divisor -> accept a masked partial last block.
    return max_tile


def hswish_pallas(x, bias=None, *, min_pallas_bytes=_MIN_PALLAS_BYTES):
    """Elementwise hswish. `x` is any-shaped (e.g. NCHW); `bias` is ignored, matching
    the PyTorch forward semantics."""
    del bias  # unused in the reference forward()
    orig_shape = x.shape
    dtype = x.dtype
    total = x.size
    itemsize = jnp.dtype(dtype).itemsize
    total_bytes = total * itemsize

    # Fast paths: tiny tensors (pallas_call launch/prologue dominates) and sizes not
    # divisible by 128 (would need a pad+slice -> extra HBM passes) use plain jnp.
    if total == 0 or total_bytes < min_pallas_bytes or total % 128 != 0:
        return _hswish_jnp(x)

    lanes = next(l for l in _LANE_CANDIDATES if total % l == 0)
    rows = total // lanes
    x2d = jnp.reshape(x, (rows, lanes))        # layout-preserving for default layouts

    tile_rows = _choose_tile_rows(rows, lanes, itemsize)
    grid = (pl.cdiv(rows, tile_rows),)

    cost = pl.CostEstimate(
        flops=4 * total,                       # add, 2x clamp, 2x mul (approx)
        transcendentals=0,
        bytes_accessed=2 * total_bytes,        # one read + one write of x
    )

    out2d = pl.pallas_call(
        _hswish_kernel,
        out_shape=jax.ShapeDtypeStruct((rows, lanes), dtype),
        grid_spec=pltpu.PrefetchScalarGridSpec(
            num_scalar_prefetch=0,
            grid=grid,
            in_specs=[pl.BlockSpec((tile_rows, lanes), lambda i: (i, 0))],
            out_specs=pl.BlockSpec((tile_rows, lanes), lambda i: (i, 0)),
        ),
        compiler_params=pltpu.CompilerParams(
            dimension_semantics=("parallel",),       # shardable across v7x's 2 TCs
            vmem_limit_bytes=_VMEM_LIMIT_BYTES,      # guard v5e's 16 MiB scoped default
        ),
        cost_estimate=cost,
        input_output_aliases={0: 0},                 # in-place safe for elementwise
    )(x2d)

    return out2d.reshape(orig_shape)


def _ref_f32(x):
    xf = x.astype(jnp.float32)
    return xf * jnp.clip(xf + 3.0, 0.0, 6.0) * (1.0 / 6.0)


if __name__ == "__main__":
    key = jax.random.PRNGKey(0)
    k1, k2, k3, k4, k5 = jax.random.split(key, 5)

    # Deterministic parameter init matching __init__ (unused in forward()).
    bias = jnp.full((5, 3, 3, 1), 3.15, dtype=jnp.float32)

    # 1) Spec-sized NCHW input: small-tensor fast path (plain fused XLA).
    x = jax.random.normal(k1, (2, 4, 16, 16), dtype=jnp.float32) * 4.0
    y = jax.block_until_ready(hswish_pallas(x, bias))
    assert y.shape == x.shape and y.dtype == x.dtype
    assert jnp.allclose(y, _ref_f32(x), atol=1e-6, rtol=1e-6), "mismatch (small/fast)"

    # 2) Same spec shape forced through the Pallas kernel (single tiny block).
    y_forced = jax.block_until_ready(hswish_pallas(x, bias, min_pallas_bytes=0))
    assert jnp.allclose(y_forced, _ref_f32(x), atol=1e-6, rtol=1e-6), "mismatch (forced)"

    # 3) Medium input (1 MiB): Pallas, single full-height lane-dense block.
    x_med = jax.random.normal(k2, (2, 8, 128, 128), dtype=jnp.float32) * 4.0
    y_med = jax.block_until_ready(hswish_pallas(x_med, bias))
    assert jnp.allclose(y_med, _ref_f32(x_med), atol=1e-6, rtol=1e-6), "mismatch (med)"

    # 4) Larger input (4 MiB): Pallas, exact even 2-block grid (2 MiB blocks).
    x_big = jax.random.normal(k3, (2, 8, 256, 256), dtype=jnp.float32) * 4.0
    y_big = jax.block_until_ready(hswish_pallas(x_big, bias))
    assert jnp.allclose(y_big, _ref_f32(x_big), atol=1e-6, rtol=1e-6), "mismatch (big)"

    # 5) bf16 input: native-bf16 compute path.
    x_bf = (jax.random.normal(k4, (2, 8, 128, 128), dtype=jnp.float32) * 4.0).astype(jnp.bfloat16)
    y_bf = jax.block_until_ready(hswish_pallas(x_bf, bias))
    assert y_bf.dtype == jnp.bfloat16
    assert jnp.allclose(y_bf.astype(jnp.float32), _ref_f32(x_bf), atol=3e-2, rtol=3e-2), "mismatch (bf16)"

    # 6) Awkward size (total % 128 != 0): plain-XLA fallback, no pad/slice passes.
    x_odd = jax.random.normal(k5, (3, 5, 37, 29), dtype=jnp.float32) * 4.0
    y_odd = jax.block_until_ready(hswish_pallas(x_odd, bias))
    assert jnp.allclose(y_odd, _ref_f32(x_odd), atol=1e-6, rtol=1e-6), "mismatch (odd)"

    print("KERNEL_OK")
</pallas_src>

<mosaic_0001>
module attributes {stable_mosaic.version = 11 : i64} {
  func.func @_hswish_kernel(%arg0: i32, %arg1: memref<1x2048xf32, #tpu.memory_space<vmem>>, %arg2: memref<1x2048xf32, #tpu.memory_space<vmem>>) attributes {dimension_semantics = [#tpu.dimension_semantics<parallel>], iteration_bounds = array<i64: 1>, scalar_prefetch = 0 : i64, scratch_operands = 0 : i64, tpu.core_type = #tpu.core_type<tc>, window_params = [{transform_indices = @transform_0, window_bounds = array<i64: 1, 2048>}, {transform_indices = @transform_1, window_bounds = array<i64: 1, 2048>}]} {
    %c0 = arith.constant 0 : index
    %c0_0 = arith.constant 0 : index
    %0 = vector.load %arg1[%c0, %c0_0] : memref<1x2048xf32, #tpu.memory_space<vmem>>, vector<1x2048xf32>
    %cst = arith.constant 3.000000e+00 : f32
    %1 = vector.broadcast %cst : f32 to vector<1x2048xf32>
    %2 = arith.addf %0, %1 : vector<1x2048xf32>
    %cst_1 = arith.constant 0.000000e+00 : f32
    %3 = vector.broadcast %cst_1 : f32 to vector<1x2048xf32>
    %4 = arith.maximumf %2, %3 : vector<1x2048xf32>
    %cst_2 = arith.constant 6.000000e+00 : f32
    %5 = vector.broadcast %cst_2 : f32 to vector<1x2048xf32>
    %6 = arith.minimumf %4, %5 : vector<1x2048xf32>
    %7 = arith.mulf %0, %6 : vector<1x2048xf32>
    %cst_3 = arith.constant 0.166666672 : f32
    %8 = vector.broadcast %cst_3 : f32 to vector<1x2048xf32>
    %9 = arith.mulf %7, %8 : vector<1x2048xf32>
    %c0_4 = arith.constant 0 : index
    %c0_5 = arith.constant 0 : index
    %10 = vector.load %arg2[%c0_4, %c0_5] : memref<1x2048xf32, #tpu.memory_space<vmem>>, vector<1x2048xf32>
    tpu.vector_store %arg2[%c0_4, %c0_5], %9 {strides = array<i32>} : memref<1x2048xf32, #tpu.memory_space<vmem>>, vector<1x2048xf32>,
    return
  }
  func.func @transform_0(%arg0: i32) -> (i32, i32) {
    %c0_i32 = arith.constant 0 : i32
    %c0_i32_0 = arith.constant 0 : i32
    return %arg0, %c0_i32 : i32, i32
  }
  func.func @transform_1(%arg0: i32) -> (i32, i32) {
    %c0_i32 = arith.constant 0 : i32
    %c0_i32_0 = arith.constant 0 : i32
    return %arg0, %c0_i32 : i32, i32
  }
}

</mosaic_0001>

<llo_original>
// kernel: tpu_custom_call.1
$region0: #{tpu_custom_call.1}
  #allocation0 [shape = 'u32[]', space=smem, size = 0x4, offset = 0x4, fixed_abs, tag = 'smem constant byte address 0x4 - core index']
  #allocation1 [shape = 'u32[144,128]{1,0:T(1,128)}', space=vmem, size = 0x12000, scoped, tag = 'internal scratch']
  %s0 = inlined_call_operand.hbm [shape: f32[1,2048], index: 0, kind: input, shape index: {}, may-alias: {0,1}]
  %s1 = inlined_call_operand.hbm [shape: f32[1,2048], index: 1, kind: output, shape index: {}, may-alias: {0,1}]
  %s2 = sld [smem:[#allocation0]]
  $region18: #{tpu_custom_call.1} parent=0
    _
  %s4 = ssub.s32 1, %s2
  %s5 = scalar_select 0, %s4, %s2
  $region1: #{tpu_custom_call.1} parent=0
    #allocation2 [shape = 'u8[8192]{0}', space=vmem, size = 0x2000, scoped, tag = 'input window, operand 0, single buffered']
    #allocation3 [shape = 's32[1]{0}', space=sflag, size = 0x4, scoped, tag = 'scoped memory for tpu_custom_call.1']
    #allocation4 [shape = 's32[1]{0}', space=sflag, size = 0x4, scoped, tag = 'scoped memory for tpu_custom_call.1']
    #allocation5 [shape = 'u8[8192]{0}', space=vmem, size = 0x2000, scoped, tag = 'output window, operand 0, single buffered']
    %6 = vsyncpa [#allocation3], 0
    %7 = vsyncpa [#allocation4], 0
    // Predicated region
    $region2: #{tpu_custom_call.1} parent=1 // pred_check
      _
    $region3: #{tpu_custom_call.1} parent=1 // pred_check_branch
      %9 = sbr.rel (0) target = $region5
    $region4: #{tpu_custom_call.1} parent=1 // pred_region
      %s11 = ssub.s32 256, 256
      %12 = vsyncadd [#allocation3], %s11
      %s14 = sshll.u32 [#allocation2], 4
      %s15 = int_to_ptr.vmem [resolvable:$true] %s14
      %17 = dma.hbm_to_vmem [thread:$0]  %s0, 256, %s15, [#allocation3]
    $region5: #{tpu_custom_call.1} parent=1 // pred_fallthru
      _
    // Predicated region
    $region6: #{tpu_custom_call.1} parent=1 // pred_check
      _
    $region7: #{tpu_custom_call.1} parent=1 // pred_check_branch
      %19 = sbr.rel (0) target = $region9
    $region8: #{tpu_custom_call.1} parent=1 // pred_region
      %20 = dma.done [#allocation3], 256
    $region9: #{tpu_custom_call.1} parent=1 // pred_fallthru
      _
    %v21 = vld [vmem:[#allocation2] sm:$0xff]
    %v22 = vld [vmem:[#allocation2 + $0x8] sm:$0xff]
    %v23 = vadd.f32 %v21, 3.0
    %v24 = vadd.f32 %v22, 3.0
    %v25 = vmax.f32 %v23, 0.0
    %v26 = vmax.f32 %v24, 0.0
    %v27 = vmin.f32 %v25, 6.0
    %v28 = vmin.f32 %v26, 6.0
    %v29 = vmul.f32 %v21, %v27
    %v30 = vmul.f32 %v22, %v28
    %v31 = vmul.f32 %v29, 0.16666667
    %v32 = vmul.f32 %v30, 0.16666667
    %33 = vst [vmem:[#allocation5] sm:$0xff] %v31
    %34 = vst [vmem:[#allocation5 + $0x8] sm:$0xff] %v32
    // Predicated region
    $region10: #{tpu_custom_call.1} parent=1 // pred_check
      _
    $region11: #{tpu_custom_call.1} parent=1 // pred_check_branch
      %36 = sbr.rel (0) target = $region13
    $region12: #{tpu_custom_call.1} parent=1 // pred_region
      %s38 = ssub.s32 256, 256
      %39 = vsyncadd [#allocation4], %s38
      %s41 = sshll.u32 [#allocation5], 4
      %s42 = int_to_ptr.vmem [resolvable:$true] %s41
      %44 = dma.vmem_to_hbm [thread:$0]  %s42, 256, %s1, [#allocation4]
    $region13: #{tpu_custom_call.1} parent=1 // pred_fallthru
      _
    // Predicated region
    $region14: #{tpu_custom_call.1} parent=1 // pred_check
      _
    $region15: #{tpu_custom_call.1} parent=1 // pred_check_branch
      %46 = sbr.rel (0) target = $region17
    $region16: #{tpu_custom_call.1} parent=1 // pred_region
      %47 = dma.done [#allocation4], 256
    $region17: #{tpu_custom_call.1} parent=1 // pred_fallthru
      _
    %48 = vsyncpa [#allocation3], 1
    %49 = vsyncpa [#allocation4], 1

</llo_original>
